<compile_context>
chip_gen: v7x
topology: tpu7x:2x2x1
jax: 0.10.0
libtpu: 0.0.40
codegen_flags: <defaults>
</compile_context>

<pallas_src>
import functools

import numpy as np

import jax
import jax.numpy as jnp
from jax.experimental import pallas as pl
from jax.experimental.pallas import tpu as pltpu


# ----------------------------------------------------------------------------
# PyTorch-equivalent channel splitting helper.
# ----------------------------------------------------------------------------
def _split_channels(num_channels, num_groups):
    split = [num_channels // num_groups for _ in range(num_groups)]
    split[0] += num_channels - sum(split)
    return split


# ----------------------------------------------------------------------------
# Fused Pallas kernel: grouped MixConv (zero-embedded to K_max) + BN + PReLU.
# ----------------------------------------------------------------------------
def _mixconv_block_kernel(x_ref, w_ref, mask_ref, p_ref, o_ref, xbuf_ref,
                          *, C_out, m, K, W, HW, M, pad, Nb, hw_chunk):
    # x_ref:    (Nb, C_in, HW)  input, flat spatial on the lane axis
    # w_ref:    (C_out, m*K*K)  BN-scale-folded weights (zero-embedded to K_max)
    # mask_ref: (K, HW)         per-kw column-validity masks (f32 0/1)
    # p_ref:    (C_out, 2)      [:,0] = folded BN bias, [:,1] = PReLU alpha
    # o_ref:    (Nb, C_out, HW) stride-1 conv+BN+PReLU result, flat spatial
    # xbuf_ref: (C_in, M+HW+M)  zero-margined copy of one image (in-kernel pad)
    C_in = x_ref.shape[1]

    # Zero ONLY the two lane margins; the interior is fully overwritten per
    # image below.  Re-zeroed every step (cheap: 2*M lanes) so correctness
    # does not depend on which TensorCore ran step 0.
    if M:
        xbuf_ref[:, pl.ds(0, M)] = jnp.zeros((C_in, M), jnp.float32)
        xbuf_ref[:, pl.ds(M + HW, M)] = jnp.zeros((C_in, M), jnp.float32)

    p = p_ref[...]                                    # (C_out, 2), loaded once
    bias = p[:, 0:1]                                  # folded BN bias
    alpha = p[:, 1:2]                                 # PReLU slope

    for b in range(Nb):                               # images blocked per step
        # In-kernel 'same' zero padding: one aligned interior copy.
        xbuf_ref[:, pl.ds(M, HW)] = x_ref[b, :, :].astype(jnp.float32)

        # Lane-chunked accumulation bounds the accumulator's live range.
        for cs in range(0, HW, hw_chunk):
            cl = min(hw_chunk, HW - cs)
            acc = jnp.zeros((C_out, cl), jnp.float32)
            for kw in range(K):
                # Column mask depends only on kw -> applied once per kw.
                col_mask = mask_ref[pl.ds(kw, 1), pl.ds(cs, cl)]      # (1, cl)
                part = jnp.zeros((C_out, cl), jnp.float32)
                for c in range(m):
                    # NOTE: for m > 1 this row slice is sublane-aligned when
                    # C_out is a multiple of 8 (true for the tested configs).
                    row0 = c * C_out
                    for kh in range(K):
                        t = (c * K + kh) * K + kw
                        off = M + (kh - pad) * W + (kw - pad) + cs    # static
                        rows = xbuf_ref[pl.ds(row0, C_out), pl.ds(off, cl)]
                        w_col = w_ref[:, pl.ds(t, 1)]                 # (C_out,1)
                        part = part + rows * w_col
                acc = acc + part * col_mask

            # Fused BatchNorm (scale already folded into weights) + PReLU.
            y = acc + bias
            y = jnp.where(y >= 0.0, y, y * alpha)
            o_ref[b, :, pl.ds(cs, cl)] = y.astype(o_ref.dtype)


def _pick_batch_block(N, per_image_elems):
    """Largest divisor of N that keeps per-step work small-ish while leaving
    >= 2 grid steps for megacore sharding whenever N > 1."""
    target_elems = 16384
    best = 1
    for nb in range(1, N + 1):
        if N % nb:
            continue
        if nb > 1 and nb * per_image_elems > target_elems:
            break
        if N // nb >= 2 or N == 1:
            best = nb
    return best


# ----------------------------------------------------------------------------
# Wrapper: MixConv_block forward = MixConv2d -> BatchNorm2d(eval) -> PReLU.
# ----------------------------------------------------------------------------
def mixconv_block_forward(x, weights, bn_gamma, bn_beta, bn_mean, bn_var,
                          prelu_alpha, kernel_sizes, stride=1, eps=1e-5,
                          batch_block=None):
    if isinstance(stride, (tuple, list)):
        sh, sw = int(stride[0]), int(stride[1])
    else:
        sh = sw = int(stride)

    N, C_in, H, W = x.shape
    num_groups = len(kernel_sizes)
    in_splits = _split_channels(C_in, num_groups)
    C_out = int(bn_gamma.shape[0])
    out_splits = _split_channels(C_out, num_groups)

    ms = [i // o for i, o in zip(in_splits, out_splits)]
    assert all(i == o * mm for i, o, mm in zip(in_splits, out_splits, ms)), \
        "in_splits must be a multiple of out_splits (PyTorch groups constraint)"
    assert all(mm == ms[0] for mm in ms), "non-uniform in/out split ratio unsupported"
    m = ms[0]
    assert all(k % 2 == 1 for k in kernel_sizes), "even kernel sizes unsupported"
    # TODO(synk): even kernel sizes would need asymmetric 'same' padding.

    K = max(kernel_sizes)
    pad = K // 2
    HW = H * W

    # ---- fold BN scale into conv weights; zero-embed small kernels to K x K ----
    scale = bn_gamma * jax.lax.rsqrt(bn_var + eps)                       # (C_out,)
    bias = bn_beta - bn_mean * scale                                     # (C_out,)
    w_rows, oc = [], 0
    for g, k in enumerate(kernel_sizes):
        og = out_splits[g]
        d = (K - k) // 2
        wg = jnp.pad(weights[g].astype(jnp.float32),
                     ((0, 0), (0, 0), (d, K - k - d), (d, K - k - d)))
        wg = wg * scale[oc:oc + og][:, None, None, None]
        w_rows.append(wg.reshape(og, m * K * K))
        oc += og
    w_all = jnp.concatenate(w_rows, axis=0)                              # (C_out, m*K*K)
    params = jnp.stack([bias, prelu_alpha.astype(jnp.float32)], axis=1)  # (C_out, 2)

    # ---- per-kw column-validity masks: pure compile-time numpy constants ----
    jcol = np.arange(HW, dtype=np.int64) % W
    mask_np = np.stack(
        [((jcol + (kw - pad) >= 0) & (jcol + (kw - pad) < W)).astype(np.float32)
         for kw in range(K)], axis=0)                                    # (K, HW)
    masks = jnp.asarray(mask_np)

    # Regroup input channels only when m > 1 so each tap reads a contiguous
    # sublane block; identity (skipped) for the common depthwise m == 1 case.
    if m > 1:
        x = x.reshape(N, C_out, m, H, W).transpose(0, 2, 1, 3, 4).reshape(N, C_in, H, W)
    x_flat = x.reshape(N, C_in, HW)                 # free reshape, lane-dense input

    # Left/right zero margins, rounded up to 128 lanes -> aligned interior store.
    M = ((pad * (W + 1) + 127) // 128) * 128 if pad > 0 else 0
    L = M + HW + M

    # HW chunk (multiple of 128 when chunking) bounds accumulator live range.
    hw_chunk = HW if HW <= 512 else 512

    # Batch images per grid step (amortize per-step overhead on tiny shapes).
    Nb = batch_block if batch_block is not None else _pick_batch_block(N, C_in * HW)
    assert N % Nb == 0

    # Explicit VMEM budget: scratch + double-buffered in/out blocks + params.
    est_bytes = 4 * (C_in * L
                     + 2 * Nb * (C_in + C_out) * HW
                     + C_out * (m * K * K) + K * HW + C_out * 2)
    vmem_limit = int(min(64 << 20, max(3 * est_bytes + (4 << 20), 8 << 20)))
    # TODO(synk): for very large C_out*HW on v7x, add an output-channel slab
    # grid axis instead of relying on a single per-step working set.

    kernel = functools.partial(_mixconv_block_kernel, C_out=C_out, m=m, K=K,
                               W=W, HW=HW, M=M, pad=pad, Nb=Nb, hw_chunk=hw_chunk)
    raw = pl.pallas_call(
        kernel,
        out_shape=jax.ShapeDtypeStruct((N, C_out, HW), x.dtype),
        grid=(N // Nb,),
        in_specs=[
            pl.BlockSpec((Nb, C_in, HW), lambda n: (n, 0, 0)),
            pl.BlockSpec((C_out, m * K * K), lambda n: (0, 0)),
            pl.BlockSpec((K, HW), lambda n: (0, 0)),
            pl.BlockSpec((C_out, 2), lambda n: (0, 0)),
        ],
        out_specs=pl.BlockSpec((Nb, C_out, HW), lambda n: (n, 0, 0)),
        scratch_shapes=[pltpu.VMEM((C_in, L), jnp.float32)],
        compiler_params=pltpu.CompilerParams(
            dimension_semantics=("parallel",),
            vmem_limit_bytes=vmem_limit),
    )(x_flat, w_all, masks, params)

    out = raw.reshape(N, C_out, H, W)
    if sh != 1 or sw != 1:
        # TODO(synk): stride>1 currently computes the stride-1 result and
        # subsamples in the wrapper; in-kernel row subsampling would avoid the
        # wasted accumulate FLOPs and output writeback.
        out = out[:, :, ::sh, ::sw]
    return out


# ----------------------------------------------------------------------------
# Pure-JAX reference (lax conv + explicit BN + PReLU) for correctness checking.
# ----------------------------------------------------------------------------
def mixconv_block_ref(x, weights, bn_gamma, bn_beta, bn_mean, bn_var,
                      prelu_alpha, kernel_sizes, stride=1, eps=1e-5):
    if isinstance(stride, (tuple, list)):
        sh, sw = int(stride[0]), int(stride[1])
    else:
        sh = sw = int(stride)
    in_splits = _split_channels(x.shape[1], len(kernel_sizes))
    outs, start = [], 0
    for g, k in enumerate(kernel_sizes):
        cin = in_splits[g]
        xg = x[:, start:start + cin]
        start += cin
        cout = weights[g].shape[0]
        p = k // 2
        outs.append(jax.lax.conv_general_dilated(
            xg, weights[g], window_strides=(sh, sw),
            padding=[(p, p), (p, p)],
            dimension_numbers=("NCHW", "OIHW", "NCHW"),
            feature_group_count=cout))
    y = jnp.concatenate(outs, axis=1)
    inv = jax.lax.rsqrt(bn_var + eps)
    y = (y - bn_mean[None, :, None, None]) * inv[None, :, None, None] \
        * bn_gamma[None, :, None, None] + bn_beta[None, :, None, None]
    y = jnp.where(y >= 0, y, y * prelu_alpha[None, :, None, None])
    return y


def _run_case(name, N, in_c, out_c, kernel_sizes, stride, H, W, seed=0):
    key = jax.random.PRNGKey(seed)
    num_groups = len(kernel_sizes)
    in_splits = _split_channels(in_c, num_groups)
    out_splits = _split_channels(out_c, num_groups)

    key, kx = jax.random.split(key)
    x = jax.random.normal(kx, (N, in_c, H, W), dtype=jnp.float32)

    # torch Conv2d layout (out_ch, in_ch/groups, kH, kW), groups=out_splits[g], bias=False
    weights = []
    for g, k in enumerate(kernel_sizes):
        key, kw_key = jax.random.split(key)
        mg = in_splits[g] // out_splits[g]
        weights.append(jax.random.normal(
            kw_key, (out_splits[g], mg, k, k), dtype=jnp.float32) * 0.1)

    # BatchNorm2d (inference stats) + PReLU parameters.
    key, k1, k2, k3, k4, k5 = jax.random.split(key, 6)
    bn_gamma = 1.0 + 0.2 * jax.random.normal(k1, (out_c,), jnp.float32)
    bn_beta = 0.1 * jax.random.normal(k2, (out_c,), jnp.float32)
    bn_mean = 0.1 * jax.random.normal(k3, (out_c,), jnp.float32)
    bn_var = 0.5 + 0.5 * jnp.abs(jax.random.normal(k4, (out_c,), jnp.float32))
    prelu_alpha = 0.25 + 0.05 * jax.random.normal(k5, (out_c,), jnp.float32)
    # TODO(synk): BatchNorm2d training-mode (batch-statistics) behavior is not
    # implemented; BN is fused in inference form using the provided running stats.

    out = mixconv_block_forward(x, weights, bn_gamma, bn_beta, bn_mean, bn_var,
                                prelu_alpha, kernel_sizes, stride=stride)
    out = jax.block_until_ready(out)
    ref = mixconv_block_ref(x, weights, bn_gamma, bn_beta, bn_mean, bn_var,
                            prelu_alpha, kernel_sizes, stride=stride)
    ref = jax.block_until_ready(ref)

    assert out.shape == ref.shape, (name, out.shape, ref.shape)
    err = float(jnp.max(jnp.abs(out - ref)))
    assert jnp.allclose(out, ref, atol=1e-4, rtol=1e-4), (name, err)


if __name__ == "__main__":
    # MixConv_block(in_c=8, out_c=8, kernel=[3, 5], stride=(1, 1))  -- m=1
    _run_case("m1_s1", N=2, in_c=8, out_c=8, kernel_sizes=[3, 5],
              stride=(1, 1), H=16, W=16)
    # Grouped path with m=2 (in_c=16, out_c=8)
    _run_case("m2_s1", N=2, in_c=16, out_c=8, kernel_sizes=[3, 5],
              stride=(1, 1), H=16, W=16)
    # Stride-2 path
    _run_case("m1_s2", N=2, in_c=8, out_c=8, kernel_sizes=[3, 5],
              stride=(2, 2), H=16, W=16)
    print("KERNEL_OK")
</pallas_src>

<mosaic_0001>
module attributes {stable_mosaic.version = 11 : i64} {
  func.func @_mixconv_block_kernel(%arg0: i32, %arg1: memref<1x8x256xf32, #tpu.memory_space<vmem>>, %arg2: memref<8x25xf32, #tpu.memory_space<vmem>>, %arg3: memref<5x256xf32, #tpu.memory_space<vmem>>, %arg4: memref<8x2xf32, #tpu.memory_space<vmem>>, %arg5: memref<1x8x256xf32, #tpu.memory_space<vmem>>, %arg6: memref<8x512xf32, #tpu.memory_space<vmem>>) attributes {dimension_semantics = [#tpu.dimension_semantics<parallel>], iteration_bounds = array<i64: 2>, scalar_prefetch = 0 : i64, scratch_operands = 1 : i64, tpu.core_type = #tpu.core_type<tc>, window_params = [{transform_indices = @transform_0, window_bounds = array<i64: 1, 8, 256>}, {pipeline_mode = #tpu.pipeline_mode<synchronous>, transform_indices = @transform_1, window_bounds = array<i64: 8, 25>}, {pipeline_mode = #tpu.pipeline_mode<synchronous>, transform_indices = @transform_2, window_bounds = array<i64: 5, 256>}, {pipeline_mode = #tpu.pipeline_mode<synchronous>, transform_indices = @transform_3, window_bounds = array<i64: 8, 2>}, {transform_indices = @transform_4, window_bounds = array<i64: 1, 8, 256>}]} {
    %cst = arith.constant 0.000000e+00 : f32
    %0 = vector.broadcast %cst : f32 to vector<8x128xf32>
    %c0 = arith.constant 0 : index
    %c0_0 = arith.constant 0 : index
    %1 = vector.load %arg6[%c0, %c0_0] : memref<8x512xf32, #tpu.memory_space<vmem>>, vector<8x128xf32>
    tpu.vector_store %arg6[%c0, %c0_0], %0 {strides = array<i32>} : memref<8x512xf32, #tpu.memory_space<vmem>>, vector<8x128xf32>,
    %cst_1 = arith.constant 0.000000e+00 : f32
    %2 = vector.broadcast %cst_1 : f32 to vector<8x128xf32>
    %c0_2 = arith.constant 0 : index
    %c384 = arith.constant 384 : index
    %3 = vector.load %arg6[%c0_2, %c384] : memref<8x512xf32, #tpu.memory_space<vmem>>, vector<8x128xf32>
    tpu.vector_store %arg6[%c0_2, %c384], %2 {strides = array<i32>} : memref<8x512xf32, #tpu.memory_space<vmem>>, vector<8x128xf32>,
    %c0_3 = arith.constant 0 : index
    %c0_4 = arith.constant 0 : index
    %4 = vector.load %arg4[%c0_3, %c0_4] : memref<8x2xf32, #tpu.memory_space<vmem>>, vector<8x2xf32>
    %5 = vector.extract_strided_slice %4 {offsets = [0, 0], sizes = [8, 1], strides = [1, 1]} : vector<8x2xf32> to vector<8x1xf32>
    %6 = vector.extract_strided_slice %4 {offsets = [0, 1], sizes = [8, 1], strides = [1, 1]} : vector<8x2xf32> to vector<8x1xf32>
    %c0_5 = arith.constant 0 : index
    %c0_6 = arith.constant 0 : index
    %c0_7 = arith.constant 0 : index
    %7 = vector.load %arg1[%c0_5, %c0_6, %c0_7] : memref<1x8x256xf32, #tpu.memory_space<vmem>>, vector<1x8x256xf32>
    %8 = vector.shape_cast %7 : vector<1x8x256xf32> to vector<8x256xf32>
    %c0_8 = arith.constant 0 : index
    %c128 = arith.constant 128 : index
    %9 = vector.load %arg6[%c0_8, %c128] : memref<8x512xf32, #tpu.memory_space<vmem>>, vector<8x256xf32>
    tpu.vector_store %arg6[%c0_8, %c128], %8 {strides = array<i32>} : memref<8x512xf32, #tpu.memory_space<vmem>>, vector<8x256xf32>,
    %cst_9 = arith.constant 0.000000e+00 : f32
    %10 = vector.broadcast %cst_9 : f32 to vector<8x256xf32>
    %c0_10 = arith.constant 0 : index
    %c0_11 = arith.constant 0 : index
    %11 = vector.load %arg3[%c0_10, %c0_11] : memref<5x256xf32, #tpu.memory_space<vmem>>, vector<1x256xf32>
    %cst_12 = arith.constant 0.000000e+00 : f32
    %12 = vector.broadcast %cst_12 : f32 to vector<8x256xf32>
    %c0_13 = arith.constant 0 : index
    %c94 = arith.constant 94 : index
    %13 = vector.load %arg6[%c0_13, %c94] : memref<8x512xf32, #tpu.memory_space<vmem>>, vector<8x256xf32>
    %c0_14 = arith.constant 0 : index
    %c0_15 = arith.constant 0 : index
    %14 = vector.load %arg2[%c0_14, %c0_15] : memref<8x25xf32, #tpu.memory_space<vmem>>, vector<8x1xf32>
    %15 = vector.broadcast %14 : vector<8x1xf32> to vector<8x256xf32>
    %16 = arith.mulf %13, %15 : vector<8x256xf32>
    %17 = arith.addf %12, %16 : vector<8x256xf32>
    %c0_16 = arith.constant 0 : index
    %c110 = arith.constant 110 : index
    %18 = vector.load %arg6[%c0_16, %c110] : memref<8x512xf32, #tpu.memory_space<vmem>>, vector<8x256xf32>
    %c0_17 = arith.constant 0 : index
    %c5 = arith.constant 5 : index
    %19 = vector.load %arg2[%c0_17, %c5] : memref<8x25xf32, #tpu.memory_space<vmem>>, vector<8x1xf32>
    %20 = vector.broadcast %19 : vector<8x1xf32> to vector<8x256xf32>
    %21 = arith.mulf %18, %20 : vector<8x256xf32>
    %22 = arith.addf %17, %21 : vector<8x256xf32>
    %c0_18 = arith.constant 0 : index
    %c126 = arith.constant 126 : index
    %23 = vector.load %arg6[%c0_18, %c126] : memref<8x512xf32, #tpu.memory_space<vmem>>, vector<8x256xf32>
    %c0_19 = arith.constant 0 : index
    %c10 = arith.constant 10 : index
    %24 = vector.load %arg2[%c0_19, %c10] : memref<8x25xf32, #tpu.memory_space<vmem>>, vector<8x1xf32>
    %25 = vector.broadcast %24 : vector<8x1xf32> to vector<8x256xf32>
    %26 = arith.mulf %23, %25 : vector<8x256xf32>
    %27 = arith.addf %22, %26 : vector<8x256xf32>
    %c0_20 = arith.constant 0 : index
    %c142 = arith.constant 142 : index
    %28 = vector.load %arg6[%c0_20, %c142] : memref<8x512xf32, #tpu.memory_space<vmem>>, vector<8x256xf32>
    %c0_21 = arith.constant 0 : index
    %c15 = arith.constant 15 : index
    %29 = vector.load %arg2[%c0_21, %c15] : memref<8x25xf32, #tpu.memory_space<vmem>>, vector<8x1xf32>
    %30 = vector.broadcast %29 : vector<8x1xf32> to vector<8x256xf32>
    %31 = arith.mulf %28, %30 : vector<8x256xf32>
    %32 = arith.addf %27, %31 : vector<8x256xf32>
    %c0_22 = arith.constant 0 : index
    %c158 = arith.constant 158 : index
    %33 = vector.load %arg6[%c0_22, %c158] : memref<8x512xf32, #tpu.memory_space<vmem>>, vector<8x256xf32>
    %c0_23 = arith.constant 0 : index
    %c20 = arith.constant 20 : index
    %34 = vector.load %arg2[%c0_23, %c20] : memref<8x25xf32, #tpu.memory_space<vmem>>, vector<8x1xf32>
    %35 = vector.broadcast %34 : vector<8x1xf32> to vector<8x256xf32>
    %36 = arith.mulf %33, %35 : vector<8x256xf32>
    %37 = arith.addf %32, %36 : vector<8x256xf32>
    %38 = vector.broadcast %11 : vector<1x256xf32> to vector<8x256xf32>
    %39 = arith.mulf %37, %38 : vector<8x256xf32>
    %40 = arith.addf %10, %39 : vector<8x256xf32>
    %c1 = arith.constant 1 : index
    %c0_24 = arith.constant 0 : index
    %41 = vector.load %arg3[%c1, %c0_24] : memref<5x256xf32, #tpu.memory_space<vmem>>, vector<1x256xf32>
    %cst_25 = arith.constant 0.000000e+00 : f32
    %42 = vector.broadcast %cst_25 : f32 to vector<8x256xf32>
    %c0_26 = arith.constant 0 : index
    %c95 = arith.constant 95 : index
    %43 = vector.load %arg6[%c0_26, %c95] : memref<8x512xf32, #tpu.memory_space<vmem>>, vector<8x256xf32>
    %c0_27 = arith.constant 0 : index
    %c1_28 = arith.constant 1 : index
    %44 = vector.load %arg2[%c0_27, %c1_28] : memref<8x25xf32, #tpu.memory_space<vmem>>, vector<8x1xf32>
    %45 = vector.broadcast %44 : vector<8x1xf32> to vector<8x256xf32>
    %46 = arith.mulf %43, %45 : vector<8x256xf32>
    %47 = arith.addf %42, %46 : vector<8x256xf32>
    %c0_29 = arith.constant 0 : index
    %c111 = arith.constant 111 : index
    %48 = vector.load %arg6[%c0_29, %c111] : memref<8x512xf32, #tpu.memory_space<vmem>>, vector<8x256xf32>
    %c0_30 = arith.constant 0 : index
    %c6 = arith.constant 6 : index
    %49 = vector.load %arg2[%c0_30, %c6] : memref<8x25xf32, #tpu.memory_space<vmem>>, vector<8x1xf32>
    %50 = vector.broadcast %49 : vector<8x1xf32> to vector<8x256xf32>
    %51 = arith.mulf %48, %50 : vector<8x256xf32>
    %52 = arith.addf %47, %51 : vector<8x256xf32>
    %c0_31 = arith.constant 0 : index
    %c127 = arith.constant 127 : index
    %53 = vector.load %arg6[%c0_31, %c127] : memref<8x512xf32, #tpu.memory_space<vmem>>, vector<8x256xf32>
    %c0_32 = arith.constant 0 : index
    %c11 = arith.constant 11 : index
    %54 = vector.load %arg2[%c0_32, %c11] : memref<8x25xf32, #tpu.memory_space<vmem>>, vector<8x1xf32>
    %55 = vector.broadcast %54 : vector<8x1xf32> to vector<8x256xf32>
    %56 = arith.mulf %53, %55 : vector<8x256xf32>
    %57 = arith.addf %52, %56 : vector<8x256xf32>
    %c0_33 = arith.constant 0 : index
    %c143 = arith.constant 143 : index
    %58 = vector.load %arg6[%c0_33, %c143] : memref<8x512xf32, #tpu.memory_space<vmem>>, vector<8x256xf32>
    %c0_34 = arith.constant 0 : index
    %c16 = arith.constant 16 : index
    %59 = vector.load %arg2[%c0_34, %c16] : memref<8x25xf32, #tpu.memory_space<vmem>>, vector<8x1xf32>
    %60 = vector.broadcast %59 : vector<8x1xf32> to vector<8x256xf32>
    %61 = arith.mulf %58, %60 : vector<8x256xf32>
    %62 = arith.addf %57, %61 : vector<8x256xf32>
    %c0_35 = arith.constant 0 : index
    %c159 = arith.constant 159 : index
    %63 = vector.load %arg6[%c0_35, %c159] : memref<8x512xf32, #tpu.memory_space<vmem>>, vector<8x256xf32>
    %c0_36 = arith.constant 0 : index
    %c21 = arith.constant 21 : index
    %64 = vector.load %arg2[%c0_36, %c21] : memref<8x25xf32, #tpu.memory_space<vmem>>, vector<8x1xf32>
    %65 = vector.broadcast %64 : vector<8x1xf32> to vector<8x256xf32>
    %66 = arith.mulf %63, %65 : vector<8x256xf32>
    %67 = arith.addf %62, %66 : vector<8x256xf32>
    %68 = vector.broadcast %41 : vector<1x256xf32> to vector<8x256xf32>
    %69 = arith.mulf %67, %68 : vector<8x256xf32>
    %70 = arith.addf %40, %69 : vector<8x256xf32>
    %c2 = arith.constant 2 : index
    %c0_37 = arith.constant 0 : index
    %71 = vector.load %arg3[%c2, %c0_37] : memref<5x256xf32, #tpu.memory_space<vmem>>, vector<1x256xf32>
    %cst_38 = arith.constant 0.000000e+00 : f32
    %72 = vector.broadcast %cst_38 : f32 to vector<8x256xf32>
    %c0_39 = arith.constant 0 : index
    %c96 = arith.constant 96 : index
    %73 = vector.load %arg6[%c0_39, %c96] : memref<8x512xf32, #tpu.memory_space<vmem>>, vector<8x256xf32>
    %c0_40 = arith.constant 0 : index
    %c2_41 = arith.constant 2 : index
    %74 = vector.load %arg2[%c0_40, %c2_41] : memref<8x25xf32, #tpu.memory_space<vmem>>, vector<8x1xf32>
    %75 = vector.broadcast %74 : vector<8x1xf32> to vector<8x256xf32>
    %76 = arith.mulf %73, %75 : vector<8x256xf32>
    %77 = arith.addf %72, %76 : vector<8x256xf32>
    %c0_42 = arith.constant 0 : index
    %c112 = arith.constant 112 : index
    %78 = vector.load %arg6[%c0_42, %c112] : memref<8x512xf32, #tpu.memory_space<vmem>>, vector<8x256xf32>
    %c0_43 = arith.constant 0 : index
    %c7 = arith.constant 7 : index
    %79 = vector.load %arg2[%c0_43, %c7] : memref<8x25xf32, #tpu.memory_space<vmem>>, vector<8x1xf32>
    %80 = vector.broadcast %79 : vector<8x1xf32> to vector<8x256xf32>
    %81 = arith.mulf %78, %80 : vector<8x256xf32>
    %82 = arith.addf %77, %81 : vector<8x256xf32>
    %c0_44 = arith.constant 0 : index
    %c128_45 = arith.constant 128 : index
    %83 = vector.load %arg6[%c0_44, %c128_45] : memref<8x512xf32, #tpu.memory_space<vmem>>, vector<8x256xf32>
    %c0_46 = arith.constant 0 : index
    %c12 = arith.constant 12 : index
    %84 = vector.load %arg2[%c0_46, %c12] : memref<8x25xf32, #tpu.memory_space<vmem>>, vector<8x1xf32>
    %85 = vector.broadcast %84 : vector<8x1xf32> to vector<8x256xf32>
    %86 = arith.mulf %83, %85 : vector<8x256xf32>
    %87 = arith.addf %82, %86 : vector<8x256xf32>
    %c0_47 = arith.constant 0 : index
    %c144 = arith.constant 144 : index
    %88 = vector.load %arg6[%c0_47, %c144] : memref<8x512xf32, #tpu.memory_space<vmem>>, vector<8x256xf32>
    %c0_48 = arith.constant 0 : index
    %c17 = arith.constant 17 : index
    %89 = vector.load %arg2[%c0_48, %c17] : memref<8x25xf32, #tpu.memory_space<vmem>>, vector<8x1xf32>
    %90 = vector.broadcast %89 : vector<8x1xf32> to vector<8x256xf32>
    %91 = arith.mulf %88, %90 : vector<8x256xf32>
    %92 = arith.addf %87, %91 : vector<8x256xf32>
    %c0_49 = arith.constant 0 : index
    %c160 = arith.constant 160 : index
    %93 = vector.load %arg6[%c0_49, %c160] : memref<8x512xf32, #tpu.memory_space<vmem>>, vector<8x256xf32>
    %c0_50 = arith.constant 0 : index
    %c22 = arith.constant 22 : index
    %94 = vector.load %arg2[%c0_50, %c22] : memref<8x25xf32, #tpu.memory_space<vmem>>, vector<8x1xf32>
    %95 = vector.broadcast %94 : vector<8x1xf32> to vector<8x256xf32>
    %96 = arith.mulf %93, %95 : vector<8x256xf32>
    %97 = arith.addf %92, %96 : vector<8x256xf32>
    %98 = vector.broadcast %71 : vector<1x256xf32> to vector<8x256xf32>
    %99 = arith.mulf %97, %98 : vector<8x256xf32>
    %100 = arith.addf %70, %99 : vector<8x256xf32>
    %c3 = arith.constant 3 : index
    %c0_51 = arith.constant 0 : index
    %101 = vector.load %arg3[%c3, %c0_51] : memref<5x256xf32, #tpu.memory_space<vmem>>, vector<1x256xf32>
    %cst_52 = arith.constant 0.000000e+00 : f32
    %102 = vector.broadcast %cst_52 : f32 to vector<8x256xf32>
    %c0_53 = arith.constant 0 : index
    %c97 = arith.constant 97 : index
    %103 = vector.load %arg6[%c0_53, %c97] : memref<8x512xf32, #tpu.memory_space<vmem>>, vector<8x256xf32>
    %c0_54 = arith.constant 0 : index
    %c3_55 = arith.constant 3 : index
    %104 = vector.load %arg2[%c0_54, %c3_55] : memref<8x25xf32, #tpu.memory_space<vmem>>, vector<8x1xf32>
    %105 = vector.broadcast %104 : vector<8x1xf32> to vector<8x256xf32>
    %106 = arith.mulf %103, %105 : vector<8x256xf32>
    %107 = arith.addf %102, %106 : vector<8x256xf32>
    %c0_56 = arith.constant 0 : index
    %c113 = arith.constant 113 : index
    %108 = vector.load %arg6[%c0_56, %c113] : memref<8x512xf32, #tpu.memory_space<vmem>>, vector<8x256xf32>
    %c0_57 = arith.constant 0 : index
    %c8 = arith.constant 8 : index
    %109 = vector.load %arg2[%c0_57, %c8] : memref<8x25xf32, #tpu.memory_space<vmem>>, vector<8x1xf32>
    %110 = vector.broadcast %109 : vector<8x1xf32> to vector<8x256xf32>
    %111 = arith.mulf %108, %110 : vector<8x256xf32>
    %112 = arith.addf %107, %111 : vector<8x256xf32>
    %c0_58 = arith.constant 0 : index
    %c129 = arith.constant 129 : index
    %113 = vector.load %arg6[%c0_58, %c129] : memref<8x512xf32, #tpu.memory_space<vmem>>, vector<8x256xf32>
    %c0_59 = arith.constant 0 : index
    %c13 = arith.constant 13 : index
    %114 = vector.load %arg2[%c0_59, %c13] : memref<8x25xf32, #tpu.memory_space<vmem>>, vector<8x1xf32>
    %115 = vector.broadcast %114 : vector<8x1xf32> to vector<8x256xf32>
    %116 = arith.mulf %113, %115 : vector<8x256xf32>
    %117 = arith.addf %112, %116 : vector<8x256xf32>
    %c0_60 = arith.constant 0 : index
    %c145 = arith.constant 145 : index
    %118 = vector.load %arg6[%c0_60, %c145] : memref<8x512xf32, #tpu.memory_space<vmem>>, vector<8x256xf32>
    %c0_61 = arith.constant 0 : index
    %c18 = arith.constant 18 : index
    %119 = vector.load %arg2[%c0_61, %c18] : memref<8x25xf32, #tpu.memory_space<vmem>>, vector<8x1xf32>
    %120 = vector.broadcast %119 : vector<8x1xf32> to vector<8x256xf32>
    %121 = arith.mulf %118, %120 : vector<8x256xf32>
    %122 = arith.addf %117, %121 : vector<8x256xf32>
    %c0_62 = arith.constant 0 : index
    %c161 = arith.constant 161 : index
    %123 = vector.load %arg6[%c0_62, %c161] : memref<8x512xf32, #tpu.memory_space<vmem>>, vector<8x256xf32>
    %c0_63 = arith.constant 0 : index
    %c23 = arith.constant 23 : index
    %124 = vector.load %arg2[%c0_63, %c23] : memref<8x25xf32, #tpu.memory_space<vmem>>, vector<8x1xf32>
    %125 = vector.broadcast %124 : vector<8x1xf32> to vector<8x256xf32>
    %126 = arith.mulf %123, %125 : vector<8x256xf32>
    %127 = arith.addf %122, %126 : vector<8x256xf32>
    %128 = vector.broadcast %101 : vector<1x256xf32> to vector<8x256xf32>
    %129 = arith.mulf %127, %128 : vector<8x256xf32>
    %130 = arith.addf %100, %129 : vector<8x256xf32>
    %c4 = arith.constant 4 : index
    %c0_64 = arith.constant 0 : index
    %131 = vector.load %arg3[%c4, %c0_64] : memref<5x256xf32, #tpu.memory_space<vmem>>, vector<1x256xf32>
    %cst_65 = arith.constant 0.000000e+00 : f32
    %132 = vector.broadcast %cst_65 : f32 to vector<8x256xf32>
    %c0_66 = arith.constant 0 : index
    %c98 = arith.constant 98 : index
    %133 = vector.load %arg6[%c0_66, %c98] : memref<8x512xf32, #tpu.memory_space<vmem>>, vector<8x256xf32>
    %c0_67 = arith.constant 0 : index
    %c4_68 = arith.constant 4 : index
    %134 = vector.load %arg2[%c0_67, %c4_68] : memref<8x25xf32, #tpu.memory_space<vmem>>, vector<8x1xf32>
    %135 = vector.broadcast %134 : vector<8x1xf32> to vector<8x256xf32>
    %136 = arith.mulf %133, %135 : vector<8x256xf32>
    %137 = arith.addf %132, %136 : vector<8x256xf32>
    %c0_69 = arith.constant 0 : index
    %c114 = arith.constant 114 : index
    %138 = vector.load %arg6[%c0_69, %c114] : memref<8x512xf32, #tpu.memory_space<vmem>>, vector<8x256xf32>
    %c0_70 = arith.constant 0 : index
    %c9 = arith.constant 9 : index
    %139 = vector.load %arg2[%c0_70, %c9] : memref<8x25xf32, #tpu.memory_space<vmem>>, vector<8x1xf32>
    %140 = vector.broadcast %139 : vector<8x1xf32> to vector<8x256xf32>
    %141 = arith.mulf %138, %140 : vector<8x256xf32>
    %142 = arith.addf %137, %141 : vector<8x256xf32>
    %c0_71 = arith.constant 0 : index
    %c130 = arith.constant 130 : index
    %143 = vector.load %arg6[%c0_71, %c130] : memref<8x512xf32, #tpu.memory_space<vmem>>, vector<8x256xf32>
    %c0_72 = arith.constant 0 : index
    %c14 = arith.constant 14 : index
    %144 = vector.load %arg2[%c0_72, %c14] : memref<8x25xf32, #tpu.memory_space<vmem>>, vector<8x1xf32>
    %145 = vector.broadcast %144 : vector<8x1xf32> to vector<8x256xf32>
    %146 = arith.mulf %143, %145 : vector<8x256xf32>
    %147 = arith.addf %142, %146 : vector<8x256xf32>
    %c0_73 = arith.constant 0 : index
    %c146 = arith.constant 146 : index
    %148 = vector.load %arg6[%c0_73, %c146] : memref<8x512xf32, #tpu.memory_space<vmem>>, vector<8x256xf32>
    %c0_74 = arith.constant 0 : index
    %c19 = arith.constant 19 : index
    %149 = vector.load %arg2[%c0_74, %c19] : memref<8x25xf32, #tpu.memory_space<vmem>>, vector<8x1xf32>
    %150 = vector.broadcast %149 : vector<8x1xf32> to vector<8x256xf32>
    %151 = arith.mulf %148, %150 : vector<8x256xf32>
    %152 = arith.addf %147, %151 : vector<8x256xf32>
    %c0_75 = arith.constant 0 : index
    %c162 = arith.constant 162 : index
    %153 = vector.load %arg6[%c0_75, %c162] : memref<8x512xf32, #tpu.memory_space<vmem>>, vector<8x256xf32>
    %c0_76 = arith.constant 0 : index
    %c24 = arith.constant 24 : index
    %154 = vector.load %arg2[%c0_76, %c24] : memref<8x25xf32, #tpu.memory_space<vmem>>, vector<8x1xf32>
    %155 = vector.broadcast %154 : vector<8x1xf32> to vector<8x256xf32>
    %156 = arith.mulf %153, %155 : vector<8x256xf32>
    %157 = arith.addf %152, %156 : vector<8x256xf32>
    %158 = vector.broadcast %131 : vector<1x256xf32> to vector<8x256xf32>
    %159 = arith.mulf %157, %158 : vector<8x256xf32>
    %160 = arith.addf %130, %159 : vector<8x256xf32>
    %161 = vector.broadcast %5 : vector<8x1xf32> to vector<8x256xf32>
    %162 = arith.addf %160, %161 : vector<8x256xf32>
    %cst_77 = arith.constant 0.000000e+00 : f32
    %163 = vector.broadcast %cst_77 : f32 to vector<8x256xf32>
    %164 = arith.cmpf oge, %162, %163 : vector<8x256xf32>
    %165 = vector.broadcast %6 : vector<8x1xf32> to vector<8x256xf32>
    %166 = arith.mulf %162, %165 : vector<8x256xf32>
    %167 = arith.select %164, %162, %166 : vector<8x256xi1>, vector<8x256xf32>
    %c0_78 = arith.constant 0 : index
    %c0_79 = arith.constant 0 : index
    %c0_80 = arith.constant 0 : index
    %168 = vector.load %arg5[%c0_78, %c0_79, %c0_80] : memref<1x8x256xf32, #tpu.memory_space<vmem>>, vector<1x8x256xf32>
    %169 = vector.shape_cast %168 : vector<1x8x256xf32> to vector<8x256xf32>
    %170 = vector.shape_cast %167 : vector<8x256xf32> to vector<1x8x256xf32>
    tpu.vector_store %arg5[%c0_78, %c0_79, %c0_80], %170 {strides = array<i32>} : memref<1x8x256xf32, #tpu.memory_space<vmem>>, vector<1x8x256xf32>,
    return
  }
  func.func @transform_0(%arg0: i32) -> (i32, i32, i32) {
    %c0_i32 = arith.constant 0 : i32
    %c0_i32_0 = arith.constant 0 : i32
    %c0_i32_1 = arith.constant 0 : i32
    return %arg0, %c0_i32, %c0_i32_0 : i32, i32, i32
  }
  func.func @transform_1(%arg0: i32) -> (i32, i32) {
    %c0_i32 = arith.constant 0 : i32
    %c0_i32_0 = arith.constant 0 : i32
    %c0_i32_1 = arith.constant 0 : i32
    return %c0_i32, %c0_i32_0 : i32, i32
  }
  func.func @transform_2(%arg0: i32) -> (i32, i32) {
    %c0_i32 = arith.constant 0 : i32
    %c0_i32_0 = arith.constant 0 : i32
    %c0_i32_1 = arith.constant 0 : i32
    return %c0_i32, %c0_i32_0 : i32, i32
  }
  func.func @transform_3(%arg0: i32) -> (i32, i32) {
    %c0_i32 = arith.constant 0 : i32
    %c0_i32_0 = arith.constant 0 : i32
    %c0_i32_1 = arith.constant 0 : i32
    return %c0_i32, %c0_i32_0 : i32, i32
  }
  func.func @transform_4(%arg0: i32) -> (i32, i32, i32) {
    %c0_i32 = arith.constant 0 : i32
    %c0_i32_0 = arith.constant 0 : i32
    %c0_i32_1 = arith.constant 0 : i32
    return %arg0, %c0_i32, %c0_i32_0 : i32, i32, i32
  }
}

</mosaic_0001>

<llo_original>
// kernel: tpu_custom_call.1
$region0: #{tpu_custom_call.1}
  #allocation0 [shape = 'u32[]', space=smem, size = 0x4, offset = 0x4, fixed_abs, tag = 'smem constant byte address 0x4 - core index']
  #allocation1 [shape = 'u32[144,128]{1,0:T(1,128)}', space=vmem, size = 0x12000, scoped, tag = 'internal scratch']
  #allocation2 [shape = 'f32[8,512]{1,0:T(8,128)}', space=vmem, size = 0x4000, scoped, tag = 'scratch operand']
  %s0 = inlined_call_operand.hbm [shape: f32[2,8,256], index: 0, kind: input, shape index: {}]
  %s1 = inlined_call_operand.hbm [shape: f32[8,25], index: 1, kind: input, shape index: {}]
  %s2 = inlined_call_operand.vmem [shape: f32[5,256], index: 2, kind: input, shape index: {}]
  %s3 = inlined_call_operand.vmem [shape: f32[8,2], index: 3, kind: input, shape index: {}]
  %s4 = inlined_call_operand.hbm [shape: f32[2,8,256], index: 4, kind: output, shape index: {}]
  %s5 = sld [smem:[#allocation0]]
  $region57: #{tpu_custom_call.1} parent=0
    _
  %s7 = ssub.s32 1, %s5
  %s8 = scalar_select 0, %s7, %s5
  $region1: #{tpu_custom_call.1} parent=0
    #allocation3 [shape = 'u8[16384]{0}', space=vmem, size = 0x4000, scoped, tag = 'input window, operand 0']
    #allocation4 [shape = 's32[2]{0}', space=sflag, size = 0x8, scoped, tag = 'scoped memory for tpu_custom_call.1']
    #allocation5 [shape = 's32[2]{0}', space=sflag, size = 0x8, scoped, tag = 'scoped memory for tpu_custom_call.1']
    #allocation6 [shape = 'u8[4096]{0}', space=vmem, size = 0x1000, scoped, tag = 'input window, operand 1, single buffered']
    #allocation7 [shape = 's32[1]{0}', space=sflag, size = 0x4, scoped, tag = 'scoped memory for tpu_custom_call.1']
    #allocation8 [shape = 'u8[16384]{0}', space=vmem, size = 0x4000, scoped, tag = 'output window, operand 0']
    %9 = vsyncpa [#allocation4], 0
    %s10 = scalar_lea.sflag [#allocation4], 1
    %11 = vsyncpa %s10, 0
    %12 = vsyncpa [#allocation7], 0
    %13 = vsyncpa [#allocation5], 0
    %s14 = scalar_lea.sflag [#allocation5], 1
    %15 = vsyncpa %s14, 0
    loop: start=0, step=1, limit=4
    $region2: #{tpu_custom_call.1} parent=1 // loop_pre_header
      _
    $region3: #{tpu_custom_call.1} parent=1 // loop_header
      %s17 = sphi 0, %s21
      %p18 = scmp.ge.s32.totalorder %s17, 4
      %s27 = sphi 0, %s29
      %s30 = sphi 0, %s27
      %s31 = sphi 0, %s30
      %s47 = sphi 0, %s31
      %s51 = sphi 0, %s51
      %s53 = sphi 0, %s51
      %s54 = sphi 0, %s53
      %s68 = sphi 0, %s54
      %s72 = sphi 0, %s72
      %s74 = sphi 0, %s72
      %s75 = sphi 0, %s74
      %s89 = sphi 0, %s75
      %s93 = sphi 0, %s93
      %s95 = sphi 0, %s93
      %s96 = sphi 0, %s95
      %s110 = sphi 0, %s96
      %s116 = sphi 0, %s118
      %s119 = sphi 0, %s116
      %s120 = sphi 0, %s119
      %s136 = sphi 0, %s120
    $region4: #{tpu_custom_call.1} parent=1 // loop_header_branch
      %20 = sbr.rel (%p18) target = $region8
    $region5: #{tpu_custom_call.1} parent=1 // loop_body
      %s22 = ssub.s32 %s17, 1
      %s23 = ssub.s32 %s17, 2
      %s24 = sadd.s32 %s17, 1
      %s25 = ssub.s32 %s17, %s24
      %p26 = scmp.eq.s32.totalorder %s25, 0
      %s28 = sadd.s32 %s27, 1
      %s29 = scalar_select %p26, %s27, %s28
      %p32 = pneg %p26
      %p33 = scmp.eq.s32.totalorder %s17, 1
      %p34 = por %p32, %p33
      %p35 = scmp.ne.s32.totalorder %s27, %s30
      %p36 = scmp.eq.s32.totalorder %s17, 0
      %p37 = por %p35, %p36
      %p38 = scmp.ne.s32.totalorder %s27, %s30
      %p39 = scmp.eq.s32.totalorder %s22, 1
      %p40 = por %p38, %p39
      %p41 = scmp.ne.s32.totalorder %s30, %s31
      %p42 = scmp.eq.s32.totalorder %s22, 0
      %p43 = por %p41, %p42
      %p44 = scmp.ne.s32.totalorder %s30, %s31
      %p45 = scmp.eq.s32.totalorder %s23, 1
      %p46 = por %p44, %p45
      %p48 = scmp.ne.s32.totalorder %s31, %s47
      %p49 = scmp.eq.s32.totalorder %s23, 0
      %p50 = por %p48, %p49
      %s52 = sadd.s32 %s51, 1
      %p55 = scmp.eq.s32.totalorder %s17, 1
      %p56 = scmp.ne.s32.totalorder %s51, %s53
      %p57 = scmp.eq.s32.totalorder %s17, 0
      %p58 = por %p56, %p57
      %p59 = scmp.ne.s32.totalorder %s51, %s53
      %p60 = scmp.eq.s32.totalorder %s22, 1
      %p61 = por %p59, %p60
      %p62 = scmp.ne.s32.totalorder %s53, %s54
      %p63 = scmp.eq.s32.totalorder %s22, 0
      %p64 = por %p62, %p63
      %p65 = scmp.ne.s32.totalorder %s53, %s54
      %p66 = scmp.eq.s32.totalorder %s23, 1
      %p67 = por %p65, %p66
      %p69 = scmp.ne.s32.totalorder %s54, %s68
      %p70 = scmp.eq.s32.totalorder %s23, 0
      %p71 = por %p69, %p70
      %s73 = sadd.s32 %s72, 1
      %p76 = scmp.eq.s32.totalorder %s17, 1
      %p77 = scmp.ne.s32.totalorder %s72, %s74
      %p78 = scmp.eq.s32.totalorder %s17, 0
      %p79 = por %p77, %p78
      %p80 = scmp.ne.s32.totalorder %s72, %s74
      %p81 = scmp.eq.s32.totalorder %s22, 1
      %p82 = por %p80, %p81
      %p83 = scmp.ne.s32.totalorder %s74, %s75
      %p84 = scmp.eq.s32.totalorder %s22, 0
      %p85 = por %p83, %p84
      %p86 = scmp.ne.s32.totalorder %s74, %s75
      %p87 = scmp.eq.s32.totalorder %s23, 1
      %p88 = por %p86, %p87
      %p90 = scmp.ne.s32.totalorder %s75, %s89
      %p91 = scmp.eq.s32.totalorder %s23, 0
      %p92 = por %p90, %p91
      %s94 = sadd.s32 %s93, 1
      %p97 = scmp.eq.s32.totalorder %s17, 1
      %p98 = scmp.ne.s32.totalorder %s93, %s95
      %p99 = scmp.eq.s32.totalorder %s17, 0
      %p100 = por %p98, %p99
      %p101 = scmp.ne.s32.totalorder %s93, %s95
      %p102 = scmp.eq.s32.totalorder %s22, 1
      %p103 = por %p101, %p102
      %p104 = scmp.ne.s32.totalorder %s95, %s96
      %p105 = scmp.eq.s32.totalorder %s22, 0
      %p106 = por %p104, %p105
      %p107 = scmp.ne.s32.totalorder %s95, %s96
      %p108 = scmp.eq.s32.totalorder %s23, 1
      %p109 = por %p107, %p108
      %p111 = scmp.ne.s32.totalorder %s96, %s110
      %p112 = scmp.eq.s32.totalorder %s23, 0
      %p113 = por %p111, %p112
      %s114 = ssub.s32 %s17, %s24
      %p115 = scmp.eq.s32.totalorder %s114, 0
      %s117 = sadd.s32 %s116, 1
      %s118 = scalar_select %p115, %s116, %s117
      %p121 = pneg %p115
      %p122 = scmp.eq.s32.totalorder %s17, 1
      %p123 = por %p121, %p122
      %p124 = scmp.ne.s32.totalorder %s116, %s119
      %p125 = scmp.eq.s32.totalorder %s17, 0
      %p126 = por %p124, %p125
      %p127 = scmp.ne.s32.totalorder %s116, %s119
      %p128 = scmp.eq.s32.totalorder %s22, 1
      %p129 = por %p127, %p128
      %p130 = scmp.ne.s32.totalorder %s119, %s120
      %p131 = scmp.eq.s32.totalorder %s22, 0
      %p132 = por %p130, %p131
      %p133 = scmp.ne.s32.totalorder %s119, %s120
      %p134 = scmp.eq.s32.totalorder %s23, 1
      %p135 = por %p133, %p134
      %p137 = scmp.ne.s32.totalorder %s120, %s136
      %p138 = scmp.eq.s32.totalorder %s23, 0
      %p139 = por %p137, %p138
      %p140 = scmp.le.s32.totalorder 1, %s17
      %p141 = scmp.lt.s32.totalorder %s17, 3
      %p142 = pnand %p140, %p141
      %p143 = pneg %p142
      // Predicated region
      $region9: #{tpu_custom_call.1} parent=5 // pred_check
        _
      $region10: #{tpu_custom_call.1} parent=5 // pred_check_branch
        %145 = sbr.rel (%p142) target = $region12
      $region11: #{tpu_custom_call.1} parent=5 // pred_region
        %s146 = ssub.s32 %s17, 1
        // Predicated region
        $region13: #{tpu_custom_call.1} parent=11 // pred_check
          %p147 = pneg %p64
        $region14: #{tpu_custom_call.1} parent=11 // pred_check_branch
          %149 = sbr.rel (%p147) target = $region16
        $region15: #{tpu_custom_call.1} parent=11 // pred_region
          %s151 = ssub.s32 128, 128
          %152 = vsyncadd [#allocation7], %s151
          %s154 = sshll.u32 [#allocation6], 4
          %s155 = int_to_ptr.vmem [resolvable:$true] %s154
          %157 = dma.hbm_to_vmem [thread:$0]  %s1, 128, %s155, [#allocation7]
        $region16: #{tpu_custom_call.1} parent=11 // pred_fallthru
          _
        // Predicated region
        $region17: #{tpu_custom_call.1} parent=11 // pred_check
          %p158 = pneg %p85
        $region18: #{tpu_custom_call.1} parent=11 // pred_check_branch
          %160 = sbr.rel (%p158) target = $region20
        $region19: #{tpu_custom_call.1} parent=11 // pred_region
          _
        $region20: #{tpu_custom_call.1} parent=11 // pred_fallthru
          _
        // Predicated region
        $region21: #{tpu_custom_call.1} parent=11 // pred_check
          %p161 = pneg %p106
        $region22: #{tpu_custom_call.1} parent=11 // pred_check_branch
          %163 = sbr.rel (%p161) target = $region24
        $region23: #{tpu_custom_call.1} parent=11 // pred_region
          _
        $region24: #{tpu_custom_call.1} parent=11 // pred_fallthru
          _
      $region12: #{tpu_custom_call.1} parent=5 // pred_fallthru
        _
      %p164 = scmp.lt.s32.totalorder %s17, 2
      // Predicated region
      $region25: #{tpu_custom_call.1} parent=5 // pred_check
        %p165 = pneg %p164
      $region26: #{tpu_custom_call.1} parent=5 // pred_check_branch
        %167 = sbr.rel (%p165) target = $region28
      $region27: #{tpu_custom_call.1} parent=5 // pred_region
        // Predicated region
        $region29: #{tpu_custom_call.1} parent=27 // pred_check
          %p168 = pneg %p37
        $region30: #{tpu_custom_call.1} parent=27 // pred_check_branch
          %170 = sbr.rel (%p168) target = $region32
        $region31: #{tpu_custom_call.1} parent=27 // pred_region
          %s171 = sand.u32 %s27, 1
          %s172 = scalar_lea.sflag [#allocation4], %s171
          %s173 = sand.u32 %s27, 1
          %s174 = smul.addr %s173, 16
          %s175 = scalar_lea.vmem [#allocation3], %s174
          %s177 = ssub.s32 256, 256
          %178 = vsyncadd %s172, %s177
          %s179 = smul.addr %s17, 2
          %s180 = smul.addr %s179, 128
          %s181 = scalar_lea.hbm %s0, %s180
          %s183 = sshll.u32 %s175, 4
          %s184 = int_to_ptr.vmem [resolvable:$true] %s183
          %186 = dma.hbm_to_vmem [thread:$0]  %s181, 256, %s184, %s172
        $region32: #{tpu_custom_call.1} parent=27 // pred_fallthru
          _
      $region28: #{tpu_custom_call.1} parent=5 // pred_fallthru
        _
      %p187 = scmp.le.s32.totalorder 1, %s17
      %p188 = scmp.lt.s32.totalorder %s17, 3
      %p189 = pnand %p187, %p188
      %p190 = pneg %p189
      // Predicated region
      $region33: #{tpu_custom_call.1} parent=5 // pred_check
        _
      $region34: #{tpu_custom_call.1} parent=5 // pred_check_branch
        %192 = sbr.rel (%p189) target = $region36
      $region35: #{tpu_custom_call.1} parent=5 // pred_region
        %s193 = ssub.s32 %s17, 1
        %s194 = sand.u32 %s30, 1
        %s195 = scalar_lea.sflag [#allocation4], %s194
        %s196 = sand.u32 %s30, 1
        %s197 = smul.addr %s196, 16
        %s198 = scalar_lea.vmem [#allocation3], %s197
        // Predicated region
        $region37: #{tpu_custom_call.1} parent=35 // pred_check
          %p199 = pneg %p43
        $region38: #{tpu_custom_call.1} parent=35 // pred_check_branch
          %201 = sbr.rel (%p199) target = $region40
        $region39: #{tpu_custom_call.1} parent=35 // pred_region
          %202 = dma.done %s195, 256
        $region40: #{tpu_custom_call.1} parent=35 // pred_fallthru
          _
        // Predicated region
        $region41: #{tpu_custom_call.1} parent=35 // pred_check
          %p203 = pneg %p64
        $region42: #{tpu_custom_call.1} parent=35 // pred_check_branch
          %205 = sbr.rel (%p203) target = $region44
        $region43: #{tpu_custom_call.1} parent=35 // pred_region
          %206 = dma.done [#allocation7], 128
        $region44: #{tpu_custom_call.1} parent=35 // pred_fallthru
          _
        %s207 = sand.u32 %s30, 1
        %s208 = scalar_lea.sflag [#allocation4], %s207
        %s209 = sand.u32 %s30, 1
        %s210 = smul.addr %s209, 16
        %s211 = scalar_lea.vmem [#allocation3], %s210
        %p212 = pneg %p43
        %p213 = pneg %p40
        %p214 = pneg %p64
        %p215 = pneg %p61
        %p216 = pneg %p85
        %p217 = pneg %p82
        %p218 = pneg %p106
        %p219 = pneg %p103
        %p220 = pneg %p132
        %p221 = pneg %p129
        %s222 = sand.u32 %s119, 1
        %s223 = scalar_lea.sflag [#allocation5], %s222
        %s224 = sand.u32 %s119, 1
        %s225 = smul.addr %s224, 16
        %s226 = scalar_lea.vmem [#allocation8], %s225
        %227 = vst [vmem:[#allocation2] sm:$0xff] 0.0
        %228 = vst [vmem:[#allocation2 + $0x18] sm:$0xff] 0.0
        %v229 = vld [vmem:[%s3] sm:$0xff]
        %v230 = vld [vmem:[%s198] sm:$0xff]
        %v231 = vld [vmem:[%s198 + $0x8] sm:$0xff]
        %232 = vst [vmem:[#allocation2 + $0x8] sm:$0xff] %v230
        %233 = vst [vmem:[#allocation2 + $0x10] sm:$0xff] %v231
        %v234 = vld [vmem:[%s2] ss:$8 sm:$0x3]
        %v235 = vld [vmem:[#allocation2] sm:$0xff]
        %v236 = vld [vmem:[#allocation2 + $0x8] sm:$0xff]
        %v237 = vld [vmem:[#allocation2 + $0x10] sm:$0xff]
        %v238 = vld [vmem:[#allocation6] sm:$0xff]
        %240 = vset.pattern.permute.xlu0 0
        %241 = vperm.xlu0 %240, %v238
        %v242 = vpop.permute.xlu0 %241
        %v244 = vmul.f32 %v235, %v242
        %v245 = vmul.f32 %v236, %v242
        %v246 = vmul.f32 %v237, %v242
        %v247 = vadd.f32 %v244, 0.0
        %v248 = vadd.f32 %v245, 0.0
        %v249 = vadd.f32 %v246, 0.0
        %250 = vset.pattern.permute.xlu0 5
        %251 = vperm.xlu0 %250, %v238
        %v252 = vpop.permute.xlu0 %251
        %v254 = vmul.f32 %v235, %v252
        %v255 = vmul.f32 %v236, %v252
        %v256 = vmul.f32 %v237, %v252
        %260 = vrot.lane.b32.xlu0 %v254, 112
        %v261 = vpop.permute.xlu0 %260
        %262 = vrot.lane.b32.xlu0 %v255, 112
        %v263 = vpop.permute.xlu0 %262
        %264 = vrot.lane.b32.xlu0 %v256, 112
        %v265 = vpop.permute.xlu0 %264
        %vm266 = vcmask 916480
        %v267 = vsel %vm266, %v261, %v263
        %v268 = vsel %vm266, %v263, %v265
        %v272 = vadd.f32 %v247, %v267
        %v273 = vadd.f32 %v248, %v268
        %v274 = vadd.f32 %v249, %v265
        %275 = vset.pattern.permute.xlu0 10
        %276 = vperm.xlu0 %275, %v238
        %v277 = vpop.permute.xlu0 %276
        %v279 = vmul.f32 %v235, %v277
        %v280 = vmul.f32 %v236, %v277
        %v281 = vmul.f32 %v237, %v277
        %285 = vrot.lane.b32.xlu0 %v279, 96
        %v286 = vpop.permute.xlu0 %285
        %287 = vrot.lane.b32.xlu0 %v280, 96
        %v288 = vpop.permute.xlu0 %287
        %289 = vrot.lane.b32.xlu0 %v281, 96
        %v290 = vpop.permute.xlu0 %289
        %vm291 = vcmask 785408
        %v292 = vsel %vm291, %v286, %v288
        %v293 = vsel %vm291, %v288, %v290
        %v297 = vadd.f32 %v272, %v292
        %v298 = vadd.f32 %v273, %v293
        %v299 = vadd.f32 %v274, %v290
        %v300 = vld [vmem:[#allocation2 + $0x8] sm:$0xff]
        %v301 = vld [vmem:[#allocation2 + $0x10] sm:$0xff]
        %v302 = vld [vmem:[#allocation2 + $0x18] sm:$0xff]
        %303 = vset.pattern.permute.xlu0 15
        %304 = vperm.xlu0 %303, %v238
        %v305 = vpop.permute.xlu0 %304
        %v307 = vmul.f32 %v300, %v305
        %v308 = vmul.f32 %v301, %v305
        %v309 = vmul.f32 %v302, %v305
        %313 = vrot.lane.b32.xlu0 %v307, 80
        %v314 = vpop.permute.xlu0 %313
        %315 = vrot.lane.b32.xlu0 %v308, 80
        %v316 = vpop.permute.xlu0 %315
        %317 = vrot.lane.b32.xlu0 %v309, 80
        %v318 = vpop.permute.xlu0 %317
        %vm319 = vcmask 654336
        %v320 = vsel %vm319, %v314, %v316
        %v321 = vsel %vm319, %v316, %v318
        %v325 = vadd.f32 %v297, %v314
        %v326 = vadd.f32 %v298, %v320
        %v327 = vadd.f32 %v299, %v321
        %328 = vset.pattern.permute.xlu0 20
        %329 = vperm.xlu0 %328, %v238
        %v330 = vpop.permute.xlu0 %329
        %v332 = vmul.f32 %v300, %v330
        %v333 = vmul.f32 %v301, %v330
        %v334 = vmul.f32 %v302, %v330
        %338 = vrot.lane.b32.xlu0 %v332, 64
        %v339 = vpop.permute.xlu0 %338
        %340 = vrot.lane.b32.xlu0 %v333, 64
        %v341 = vpop.permute.xlu0 %340
        %342 = vrot.lane.b32.xlu0 %v334, 64
        %v343 = vpop.permute.xlu0 %342
        %vm344 = vcmask 523264
        %v345 = vsel %vm344, %v339, %v341
        %v346 = vsel %vm344, %v341, %v343
        %v350 = vadd.f32 %v325, %v339
        %v351 = vadd.f32 %v326, %v345
        %v352 = vadd.f32 %v327, %v346
        %v354 = vlaneseq
        %v355 = vshrl.u32 %v354, 7
        %v356 = vsub.s32 0, %v355
        %v357 = vrot.slane %v234, %v356
        %v358 = vlaneseq
        %v359 = vshrl.u32 %v358, 7
        %v360 = vsub.s32 1, %v359
        %v361 = vrot.slane %v234, %v360
        %362 = vrot.lane.b32.xlu0 %v357, 94
        %v363 = vpop.permute.xlu0 %362
        %364 = vrot.lane.b32.xlu0 %v361, 94
        %v365 = vpop.permute.xlu0 %364
        %vm366 = vcmask 769024
        %v367 = vsel %vm366, %v363, %v365
        %v371 = vmul.f32 %v350, %v363
        %v372 = vmul.f32 %v351, %v367
        %v373 = vmul.f32 %v352, %v365
        %v374 = vadd.f32 %v371, 0.0
        %v375 = vadd.f32 %v372, 0.0
        %v376 = vadd.f32 %v373, 0.0
        %s377 = scalar_lea.vmem %s2, 1
        %v378 = vld [vmem:[%s377] ss:$8 sm:$0x3]
        %379 = vset.pattern.permute.xlu0 1
        %380 = vperm.xlu0 %379, %v238
        %v381 = vpop.permute.xlu0 %380
        %v383 = vmul.f32 %v235, %v381
        %v384 = vmul.f32 %v236, %v381
        %v385 = vmul.f32 %v237, %v381
        %v386 = vadd.f32 %v383, 0.0
        %v387 = vadd.f32 %v384, 0.0
        %v388 = vadd.f32 %v385, 0.0
        %389 = vset.pattern.permute.xlu0 6
        %390 = vperm.xlu0 %389, %v238
        %v391 = vpop.permute.xlu0 %390
        %v393 = vmul.f32 %v235, %v391
        %v394 = vmul.f32 %v236, %v391
        %v395 = vmul.f32 %v237, %v391
        %399 = vrot.lane.b32.xlu0 %v393, 112
        %v400 = vpop.permute.xlu0 %399
        %401 = vrot.lane.b32.xlu0 %v394, 112
        %v402 = vpop.permute.xlu0 %401
        %403 = vrot.lane.b32.xlu0 %v395, 112
        %v404 = vpop.permute.xlu0 %403
        %v405 = vsel %vm266, %v400, %v402
        %v406 = vsel %vm266, %v402, %v404
        %v410 = vadd.f32 %v386, %v405
        %v411 = vadd.f32 %v387, %v406
        %v412 = vadd.f32 %v388, %v404
        %413 = vset.pattern.permute.xlu0 11
        %414 = vperm.xlu0 %413, %v238
        %v415 = vpop.permute.xlu0 %414
        %v417 = vmul.f32 %v235, %v415
        %v418 = vmul.f32 %v236, %v415
        %v419 = vmul.f32 %v237, %v415
        %423 = vrot.lane.b32.xlu0 %v417, 96
        %v424 = vpop.permute.xlu0 %423
        %425 = vrot.lane.b32.xlu0 %v418, 96
        %v426 = vpop.permute.xlu0 %425
        %427 = vrot.lane.b32.xlu0 %v419, 96
        %v428 = vpop.permute.xlu0 %427
        %v429 = vsel %vm291, %v424, %v426
        %v430 = vsel %vm291, %v426, %v428
        %v434 = vadd.f32 %v410, %v429
        %v435 = vadd.f32 %v411, %v430
        %v436 = vadd.f32 %v412, %v428
        %437 = vset.pattern.permute.xlu0 16
        %438 = vperm.xlu0 %437, %v238
        %v439 = vpop.permute.xlu0 %438
        %v441 = vmul.f32 %v300, %v439
        %v442 = vmul.f32 %v301, %v439
        %v443 = vmul.f32 %v302, %v439
        %447 = vrot.lane.b32.xlu0 %v441, 80
        %v448 = vpop.permute.xlu0 %447
        %449 = vrot.lane.b32.xlu0 %v442, 80
        %v450 = vpop.permute.xlu0 %449
        %451 = vrot.lane.b32.xlu0 %v443, 80
        %v452 = vpop.permute.xlu0 %451
        %v453 = vsel %vm319, %v448, %v450
        %v454 = vsel %vm319, %v450, %v452
        %v458 = vadd.f32 %v434, %v448
        %v459 = vadd.f32 %v435, %v453
        %v460 = vadd.f32 %v436, %v454
        %461 = vset.pattern.permute.xlu0 21
        %462 = vperm.xlu0 %461, %v238
        %v463 = vpop.permute.xlu0 %462
        %v465 = vmul.f32 %v300, %v463
        %v466 = vmul.f32 %v301, %v463
        %v467 = vmul.f32 %v302, %v463
        %471 = vrot.lane.b32.xlu0 %v465, 64
        %v472 = vpop.permute.xlu0 %471
        %473 = vrot.lane.b32.xlu0 %v466, 64
        %v474 = vpop.permute.xlu0 %473
        %475 = vrot.lane.b32.xlu0 %v467, 64
        %v476 = vpop.permute.xlu0 %475
        %v477 = vsel %vm344, %v472, %v474
        %v478 = vsel %vm344, %v474, %v476
        %v482 = vadd.f32 %v458, %v472
        %v483 = vadd.f32 %v459, %v477
        %v484 = vadd.f32 %v460, %v478
        %v486 = vlaneseq
        %v487 = vshrl.u32 %v486, 7
        %v488 = vsub.s32 0, %v487
        %v489 = vrot.slane %v378, %v488
        %v490 = vlaneseq
        %v491 = vshrl.u32 %v490, 7
        %v492 = vsub.s32 1, %v491
        %v493 = vrot.slane %v378, %v492
        %494 = vrot.lane.b32.xlu0 %v489, 95
        %v495 = vpop.permute.xlu0 %494
        %496 = vrot.lane.b32.xlu0 %v493, 95
        %v497 = vpop.permute.xlu0 %496
        %vm498 = vcmask 777216
        %v499 = vsel %vm498, %v495, %v497
        %v503 = vmul.f32 %v482, %v495
        %v504 = vmul.f32 %v483, %v499
        %v505 = vmul.f32 %v484, %v497
        %509 = vrot.lane.b32.xlu0 %v503, 127
        %v510 = vpop.permute.xlu0 %509
        %511 = vrot.lane.b32.xlu0 %v504, 127
        %v512 = vpop.permute.xlu0 %511
        %513 = vrot.lane.b32.xlu0 %v505, 127
        %v514 = vpop.permute.xlu0 %513
        %vm515 = vcmask 1039360
        %v516 = vsel %vm515, %v510, %v512
        %v517 = vsel %vm515, %v512, %v514
        %v521 = vadd.f32 %v374, %v516
        %v522 = vadd.f32 %v375, %v517
        %v523 = vadd.f32 %v376, %v514
        %s524 = scalar_lea.vmem %s2, 2
        %v525 = vld [vmem:[%s524] ss:$8 sm:$0x3]
        %526 = vset.pattern.permute.xlu0 2
        %527 = vperm.xlu0 %526, %v238
        %v528 = vpop.permute.xlu0 %527
        %v530 = vmul.f32 %v235, %v528
        %v531 = vmul.f32 %v236, %v528
        %v532 = vmul.f32 %v237, %v528
        %v533 = vadd.f32 %v530, 0.0
        %v534 = vadd.f32 %v531, 0.0
        %v535 = vadd.f32 %v532, 0.0
        %536 = vset.pattern.permute.xlu0 7
        %537 = vperm.xlu0 %536, %v238
        %v538 = vpop.permute.xlu0 %537
        %v540 = vmul.f32 %v235, %v538
        %v541 = vmul.f32 %v236, %v538
        %v542 = vmul.f32 %v237, %v538
        %546 = vrot.lane.b32.xlu0 %v540, 112
        %v547 = vpop.permute.xlu0 %546
        %548 = vrot.lane.b32.xlu0 %v541, 112
        %v549 = vpop.permute.xlu0 %548
        %550 = vrot.lane.b32.xlu0 %v542, 112
        %v551 = vpop.permute.xlu0 %550
        %v552 = vsel %vm266, %v547, %v549
        %v553 = vsel %vm266, %v549, %v551
        %v557 = vadd.f32 %v533, %v552
        %v558 = vadd.f32 %v534, %v553
        %v559 = vadd.f32 %v535, %v551
        %560 = vset.pattern.permute.xlu0 12
        %561 = vperm.xlu0 %560, %v238
        %v562 = vpop.permute.xlu0 %561
        %v564 = vmul.f32 %v236, %v562
        %v565 = vmul.f32 %v237, %v562
        %568 = vrot.lane.b32.xlu0 %v564, 96
        %v569 = vpop.permute.xlu0 %568
        %570 = vrot.lane.b32.xlu0 %v565, 96
        %v571 = vpop.permute.xlu0 %570
        %v572 = vsel %vm291, %v569, %v571
        %v576 = vadd.f32 %v557, %v569
        %v577 = vadd.f32 %v558, %v572
        %v578 = vadd.f32 %v559, %v571
        %579 = vset.pattern.permute.xlu0 17
        %580 = vperm.xlu0 %579, %v238
        %v581 = vpop.permute.xlu0 %580
        %v583 = vmul.f32 %v300, %v581
        %v584 = vmul.f32 %v301, %v581
        %v585 = vmul.f32 %v302, %v581
        %589 = vrot.lane.b32.xlu0 %v583, 80
        %v590 = vpop.permute.xlu0 %589
        %591 = vrot.lane.b32.xlu0 %v584, 80
        %v592 = vpop.permute.xlu0 %591
        %593 = vrot.lane.b32.xlu0 %v585, 80
        %v594 = vpop.permute.xlu0 %593
        %v595 = vsel %vm319, %v590, %v592
        %v596 = vsel %vm319, %v592, %v594
        %v600 = vadd.f32 %v576, %v590
        %v601 = vadd.f32 %v577, %v595
        %v602 = vadd.f32 %v578, %v596
        %603 = vset.pattern.permute.xlu0 22
        %604 = vperm.xlu0 %603, %v238
        %v605 = vpop.permute.xlu0 %604
        %v607 = vmul.f32 %v300, %v605
        %v608 = vmul.f32 %v301, %v605
        %v609 = vmul.f32 %v302, %v605
        %613 = vrot.lane.b32.xlu0 %v607, 64
        %v614 = vpop.permute.xlu0 %613
        %615 = vrot.lane.b32.xlu0 %v608, 64
        %v616 = vpop.permute.xlu0 %615
        %617 = vrot.lane.b32.xlu0 %v609, 64
        %v618 = vpop.permute.xlu0 %617
        %v619 = vsel %vm344, %v614, %v616
        %v620 = vsel %vm344, %v616, %v618
        %v624 = vadd.f32 %v600, %v614
        %v625 = vadd.f32 %v601, %v619
        %v626 = vadd.f32 %v602, %v620
        %v628 = vlaneseq
        %v629 = vshrl.u32 %v628, 7
        %v630 = vsub.s32 0, %v629
        %v631 = vrot.slane %v525, %v630
        %v632 = vlaneseq
        %v633 = vshrl.u32 %v632, 7
        %v634 = vsub.s32 1, %v633
        %v635 = vrot.slane %v525, %v634
        %636 = vrot.lane.b32.xlu0 %v631, 96
        %v637 = vpop.permute.xlu0 %636
        %638 = vrot.lane.b32.xlu0 %v635, 96
        %v639 = vpop.permute.xlu0 %638
        %v640 = vsel %vm291, %v637, %v639
        %v644 = vmul.f32 %v624, %v637
        %v645 = vmul.f32 %v625, %v640
        %v646 = vmul.f32 %v626, %v639
        %650 = vrot.lane.b32.xlu0 %v644, 126
        %v651 = vpop.permute.xlu0 %650
        %652 = vrot.lane.b32.xlu0 %v645, 126
        %v653 = vpop.permute.xlu0 %652
        %654 = vrot.lane.b32.xlu0 %v646, 126
        %v655 = vpop.permute.xlu0 %654
        %vm656 = vcmask 1031168
        %v657 = vsel %vm656, %v651, %v653
        %v658 = vsel %vm656, %v653, %v655
        %v662 = vadd.f32 %v521, %v657
        %v663 = vadd.f32 %v522, %v658
        %v664 = vadd.f32 %v523, %v655
        %s665 = scalar_lea.vmem %s2, 3
        %v666 = vld [vmem:[%s665] ss:$8 sm:$0x3]
        %667 = vset.pattern.permute.xlu0 3
        %668 = vperm.xlu0 %667, %v238
        %v669 = vpop.permute.xlu0 %668
        %v671 = vmul.f32 %v235, %v669
        %v672 = vmul.f32 %v236, %v669
        %v673 = vmul.f32 %v237, %v669
        %v674 = vadd.f32 %v671, 0.0
        %v675 = vadd.f32 %v672, 0.0
        %v676 = vadd.f32 %v673, 0.0
        %677 = vset.pattern.permute.xlu0 8
        %678 = vperm.xlu0 %677, %v238
        %v679 = vpop.permute.xlu0 %678
        %v681 = vmul.f32 %v235, %v679
        %v682 = vmul.f32 %v236, %v679
        %v683 = vmul.f32 %v237, %v679
        %687 = vrot.lane.b32.xlu0 %v681, 112
        %v688 = vpop.permute.xlu0 %687
        %689 = vrot.lane.b32.xlu0 %v682, 112
        %v690 = vpop.permute.xlu0 %689
        %691 = vrot.lane.b32.xlu0 %v683, 112
        %v692 = vpop.permute.xlu0 %691
        %v693 = vsel %vm266, %v688, %v690
        %v694 = vsel %vm266, %v690, %v692
        %v698 = vadd.f32 %v674, %v693
        %v699 = vadd.f32 %v675, %v694
        %v700 = vadd.f32 %v676, %v692
        %701 = vset.pattern.permute.xlu0 13
        %702 = vperm.xlu0 %701, %v238
        %v703 = vpop.permute.xlu0 %702
        %v705 = vmul.f32 %v300, %v703
        %v706 = vmul.f32 %v301, %v703
        %v707 = vmul.f32 %v302, %v703
        %711 = vrot.lane.b32.xlu0 %v705, 96
        %v712 = vpop.permute.xlu0 %711
        %713 = vrot.lane.b32.xlu0 %v706, 96
        %v714 = vpop.permute.xlu0 %713
        %715 = vrot.lane.b32.xlu0 %v707, 96
        %v716 = vpop.permute.xlu0 %715
        %v717 = vsel %vm291, %v712, %v714
        %v718 = vsel %vm291, %v714, %v716
        %v722 = vadd.f32 %v698, %v712
        %v723 = vadd.f32 %v699, %v717
        %v724 = vadd.f32 %v700, %v718
        %725 = vset.pattern.permute.xlu0 18
        %726 = vperm.xlu0 %725, %v238
        %v727 = vpop.permute.xlu0 %726
        %v729 = vmul.f32 %v300, %v727
        %v730 = vmul.f32 %v301, %v727
        %v731 = vmul.f32 %v302, %v727
        %735 = vrot.lane.b32.xlu0 %v729, 80
        %v736 = vpop.permute.xlu0 %735
        %737 = vrot.lane.b32.xlu0 %v730, 80
        %v738 = vpop.permute.xlu0 %737
        %739 = vrot.lane.b32.xlu0 %v731, 80
        %v740 = vpop.permute.xlu0 %739
        %v741 = vsel %vm319, %v736, %v738
        %v742 = vsel %vm319, %v738, %v740
        %v746 = vadd.f32 %v722, %v736
        %v747 = vadd.f32 %v723, %v741
        %v748 = vadd.f32 %v724, %v742
        %749 = vset.pattern.permute.xlu0 23
        %750 = vperm.xlu0 %749, %v238
        %v751 = vpop.permute.xlu0 %750
        %v753 = vmul.f32 %v300, %v751
        %v754 = vmul.f32 %v301, %v751
        %v755 = vmul.f32 %v302, %v751
        %759 = vrot.lane.b32.xlu0 %v753, 64
        %v760 = vpop.permute.xlu0 %759
        %761 = vrot.lane.b32.xlu0 %v754, 64
        %v762 = vpop.permute.xlu0 %761
        %763 = vrot.lane.b32.xlu0 %v755, 64
        %v764 = vpop.permute.xlu0 %763
        %v765 = vsel %vm344, %v760, %v762
        %v766 = vsel %vm344, %v762, %v764
        %v770 = vadd.f32 %v746, %v760
        %v771 = vadd.f32 %v747, %v765
        %v772 = vadd.f32 %v748, %v766
        %v774 = vlaneseq
        %v775 = vshrl.u32 %v774, 7
        %v776 = vsub.s32 0, %v775
        %v777 = vrot.slane %v666, %v776
        %v778 = vlaneseq
        %v779 = vshrl.u32 %v778, 7
        %v780 = vsub.s32 1, %v779
        %v781 = vrot.slane %v666, %v780
        %782 = vrot.lane.b32.xlu0 %v777, 97
        %v783 = vpop.permute.xlu0 %782
        %784 = vrot.lane.b32.xlu0 %v781, 97
        %v785 = vpop.permute.xlu0 %784
        %vm786 = vcmask 793600
        %v787 = vsel %vm786, %v783, %v785
        %v791 = vmul.f32 %v770, %v783
        %v792 = vmul.f32 %v771, %v787
        %v793 = vmul.f32 %v772, %v785
        %797 = vrot.lane.b32.xlu0 %v791, 125
        %v798 = vpop.permute.xlu0 %797
        %799 = vrot.lane.b32.xlu0 %v792, 125
        %v800 = vpop.permute.xlu0 %799
        %801 = vrot.lane.b32.xlu0 %v793, 125
        %v802 = vpop.permute.xlu0 %801
        %vm803 = vcmask 1022976
        %v804 = vsel %vm803, %v798, %v800
        %v805 = vsel %vm803, %v800, %v802
        %v809 = vadd.f32 %v662, %v804
        %v810 = vadd.f32 %v663, %v805
        %v811 = vadd.f32 %v664, %v802
        %s812 = scalar_lea.vmem %s2, 4
        %v813 = vld [vmem:[%s812] ss:$8 sm:$0x3]
        %814 = vset.pattern.permute.xlu0 4
        %815 = vperm.xlu0 %814, %v238
        %v816 = vpop.permute.xlu0 %815
        %v818 = vmul.f32 %v235, %v816
        %v819 = vmul.f32 %v236, %v816
        %v820 = vmul.f32 %v237, %v816
        %v821 = vadd.f32 %v818, 0.0
        %v822 = vadd.f32 %v819, 0.0
        %v823 = vadd.f32 %v820, 0.0
        %824 = vset.pattern.permute.xlu0 9
        %825 = vperm.xlu0 %824, %v238
        %v826 = vpop.permute.xlu0 %825
        %v828 = vmul.f32 %v235, %v826
        %v829 = vmul.f32 %v236, %v826
        %v830 = vmul.f32 %v237, %v826
        %834 = vrot.lane.b32.xlu0 %v828, 112
        %v835 = vpop.permute.xlu0 %834
        %836 = vrot.lane.b32.xlu0 %v829, 112
        %v837 = vpop.permute.xlu0 %836
        %838 = vrot.lane.b32.xlu0 %v830, 112
        %v839 = vpop.permute.xlu0 %838
        %v840 = vsel %vm266, %v835, %v837
        %v841 = vsel %vm266, %v837, %v839
        %v845 = vadd.f32 %v821, %v840
        %v846 = vadd.f32 %v822, %v841
        %v847 = vadd.f32 %v823, %v839
        %848 = vset.pattern.permute.xlu0 14
        %849 = vperm.xlu0 %848, %v238
        %v850 = vpop.permute.xlu0 %849
        %v852 = vmul.f32 %v300, %v850
        %v853 = vmul.f32 %v301, %v850
        %v854 = vmul.f32 %v302, %v850
        %858 = vrot.lane.b32.xlu0 %v852, 96
        %v859 = vpop.permute.xlu0 %858
        %860 = vrot.lane.b32.xlu0 %v853, 96
        %v861 = vpop.permute.xlu0 %860
        %862 = vrot.lane.b32.xlu0 %v854, 96
        %v863 = vpop.permute.xlu0 %862
        %v864 = vsel %vm291, %v859, %v861
        %v865 = vsel %vm291, %v861, %v863
        %v869 = vadd.f32 %v845, %v859
        %v870 = vadd.f32 %v846, %v864
        %v871 = vadd.f32 %v847, %v865
        %872 = vset.pattern.permute.xlu0 19
        %873 = vperm.xlu0 %872, %v238
        %v874 = vpop.permute.xlu0 %873
        %v876 = vmul.f32 %v300, %v874
        %v877 = vmul.f32 %v301, %v874
        %v878 = vmul.f32 %v302, %v874
        %882 = vrot.lane.b32.xlu0 %v876, 80
        %v883 = vpop.permute.xlu0 %882
        %884 = vrot.lane.b32.xlu0 %v877, 80
        %v885 = vpop.permute.xlu0 %884
        %886 = vrot.lane.b32.xlu0 %v878, 80
        %v887 = vpop.permute.xlu0 %886
        %v888 = vsel %vm319, %v883, %v885
        %v889 = vsel %vm319, %v885, %v887
        %v893 = vadd.f32 %v869, %v883
        %v894 = vadd.f32 %v870, %v888
        %v895 = vadd.f32 %v871, %v889
        %896 = vset.pattern.permute.xlu0 24
        %897 = vperm.xlu0 %896, %v238
        %v898 = vpop.permute.xlu0 %897
        %v900 = vmul.f32 %v300, %v898
        %v901 = vmul.f32 %v301, %v898
        %v902 = vmul.f32 %v302, %v898
        %906 = vrot.lane.b32.xlu0 %v900, 64
        %v907 = vpop.permute.xlu0 %906
        %908 = vrot.lane.b32.xlu0 %v901, 64
        %v909 = vpop.permute.xlu0 %908
        %910 = vrot.lane.b32.xlu0 %v902, 64
        %v911 = vpop.permute.xlu0 %910
        %v912 = vsel %vm344, %v907, %v909
        %v913 = vsel %vm344, %v909, %v911
        %v917 = vadd.f32 %v893, %v907
        %v918 = vadd.f32 %v894, %v912
        %v919 = vadd.f32 %v895, %v913
        %v921 = vlaneseq
        %v922 = vshrl.u32 %v921, 7
        %v923 = vsub.s32 0, %v922
        %v924 = vrot.slane %v813, %v923
        %v925 = vlaneseq
        %v926 = vshrl.u32 %v925, 7
        %v927 = vsub.s32 1, %v926
        %v928 = vrot.slane %v813, %v927
        %929 = vrot.lane.b32.xlu0 %v924, 98
        %v930 = vpop.permute.xlu0 %929
        %931 = vrot.lane.b32.xlu0 %v928, 98
        %v932 = vpop.permute.xlu0 %931
        %vm933 = vcmask 801792
        %v934 = vsel %vm933, %v930, %v932
        %v938 = vmul.f32 %v917, %v930
        %v939 = vmul.f32 %v918, %v934
        %v940 = vmul.f32 %v919, %v932
        %944 = vrot.lane.b32.xlu0 %v938, 124
        %v945 = vpop.permute.xlu0 %944
        %946 = vrot.lane.b32.xlu0 %v939, 124
        %v947 = vpop.permute.xlu0 %946
        %948 = vrot.lane.b32.xlu0 %v940, 124
        %v949 = vpop.permute.xlu0 %948
        %vm950 = vcmask 1014784
        %v951 = vsel %vm950, %v945, %v947
        %v952 = vsel %vm950, %v947, %v949
        %v956 = vadd.f32 %v809, %v951
        %v957 = vadd.f32 %v810, %v952
        %v958 = vadd.f32 %v811, %v949
        %960 = vset.pattern.permute.xlu0 0
        %961 = vperm.xlu0 %960, %v229
        %v962 = vpop.permute.xlu0 %961
        %v964 = vadd.f32 %v956, %v962
        %v965 = vadd.f32 %v957, %v962
        %v966 = vadd.f32 %v958, %v962
        %vm967 = vcmp.ge.f32.partialorder %v964, 0.0
        %vm968 = vcmp.ge.f32.partialorder %v965, 0.0
        %vm969 = vcmp.ge.f32.partialorder %v966, 0.0
        %970 = vset.pattern.permute.xlu0 1
        %971 = vperm.xlu0 %970, %v229
        %v972 = vpop.permute.xlu0 %971
        %v974 = vmul.f32 %v964, %v972
        %v975 = vmul.f32 %v965, %v972
        %v976 = vmul.f32 %v966, %v972
        %v977 = vsel %vm967, %v964, %v974
        %v978 = vsel %vm968, %v965, %v975
        %v979 = vsel %vm969, %v966, %v976
        %983 = vrot.lane.b32.xlu0 %v977, 34
        %v984 = vpop.permute.xlu0 %983
        %985 = vrot.lane.b32.xlu0 %v978, 34
        %v986 = vpop.permute.xlu0 %985
        %987 = vrot.lane.b32.xlu0 %v979, 34
        %v988 = vpop.permute.xlu0 %987
        %vm989 = vcmask 277504
        %v990 = vsel %vm989, %v984, %v986
        %v991 = vsel %vm989, %v986, %v988
        %994 = vst [vmem:[%s226] sm:$0xff] %v990
        %995 = vst [vmem:[%s226 + $0x8] sm:$0xff] %v991
        %s996 = sand.u32 %s119, 1
        %s997 = scalar_lea.sflag [#allocation5], %s996
        %s998 = sand.u32 %s119, 1
        %s999 = smul.addr %s998, 16
        %s1000 = scalar_lea.vmem [#allocation8], %s999
        // Predicated region
        $region45: #{tpu_custom_call.1} parent=35 // pred_check
          %p1001 = pneg %p129
        $region46: #{tpu_custom_call.1} parent=35 // pred_check_branch
          %1003 = sbr.rel (%p1001) target = $region48
        $region47: #{tpu_custom_call.1} parent=35 // pred_region
          %s1005 = ssub.s32 256, 256
          %1006 = vsyncadd %s997, %s1005
          %s1007 = smul.addr %s22, 2
          %s1008 = smul.addr %s1007, 128
          %s1009 = scalar_lea.hbm %s4, %s1008
          %s1011 = sshll.u32 %s1000, 4
          %s1012 = int_to_ptr.vmem [resolvable:$true] %s1011
          %1014 = dma.vmem_to_hbm [thread:$0]  %s1012, 256, %s1009, %s997
        $region48: #{tpu_custom_call.1} parent=35 // pred_fallthru
          _
      $region36: #{tpu_custom_call.1} parent=5 // pred_fallthru
        _
      %p1015 = scmp.le.s32.totalorder 2, %s17
      // Predicated region
      $region49: #{tpu_custom_call.1} parent=5 // pred_check
        %p1016 = pneg %p1015
      $region50: #{tpu_custom_call.1} parent=5 // pred_check_branch
        %1018 = sbr.rel (%p1016) target = $region52
      $region51: #{tpu_custom_call.1} parent=5 // pred_region
        %s1019 = ssub.s32 %s17, 2
        // Predicated region
        $region53: #{tpu_custom_call.1} parent=51 // pred_check
          %p1020 = pneg %p135
        $region54: #{tpu_custom_call.1} parent=51 // pred_check_branch
          %1022 = sbr.rel (%p1020) target = $region56
        $region55: #{tpu_custom_call.1} parent=51 // pred_region
          %s1023 = sand.u32 %s120, 1
          %s1024 = scalar_lea.sflag [#allocation5], %s1023
          %s1025 = sand.u32 %s120, 1
          %s1026 = smul.addr %s1025, 16
          %s1027 = scalar_lea.vmem [#allocation8], %s1026
          %1028 = dma.done %s1024, 256
        $region56: #{tpu_custom_call.1} parent=51 // pred_fallthru
          _
      $region52: #{tpu_custom_call.1} parent=5 // pred_fallthru
        _
    $region6: #{tpu_custom_call.1} parent=1 // loop_footer
      %s21 = sadd.s32 1, %s17
    $region7: #{tpu_custom_call.1} parent=1 // loop_footer_branch
      %16 = sbr.rel target = $region3
    $region8: #{tpu_custom_call.1} parent=1 // loop_exit
      _
    %1029 = vsyncpa [#allocation4], 1
    %s1030 = scalar_lea.sflag [#allocation4], 1
    %1031 = vsyncpa %s1030, 1
    %1032 = vsyncpa [#allocation7], 1
    %1033 = vsyncpa [#allocation5], 1
    %s1034 = scalar_lea.sflag [#allocation5], 1
    %1035 = vsyncpa %s1034, 1

</llo_original>
